<compile_context>
chip_gen: v5e
topology: v5e:2x2
jax: 0.10.0
libtpu: 0.0.40
codegen_flags: <defaults>
</compile_context>

<pallas_src>
import jax
import jax.numpy as jnp
from jax.experimental import pallas as pl
from jax.experimental.pallas import tpu as pltpu

_NEG_BIG = -1e30  # padded-logit bias: exp(-1e30 - m) == 0, no inf arithmetic


def _round_up(n, m):
    return ((n + m - 1) // m) * m


def phi_pequena_kernel(x_ref, w1_ref, b1_ref, w23_ref, b23_ref, o_ref):
    x = x_ref[...]                                                     # (TB, F)

    # linear_1 + relu_1
    h1 = jnp.dot(x, w1_ref[...], preferred_element_type=jnp.float32) + b1_ref[...]
    h1 = jnp.maximum(h1, 0.0)                                          # (TB, 2F)

    # fused last_linear @ linear_last (lane-padded to C_pad columns)
    logits = jnp.dot(h1, w23_ref[...], preferred_element_type=jnp.float32) + b23_ref[...]

    # softmax over the class axis; padded columns carry -1e30 bias -> exp == 0
    m = jnp.max(logits, axis=1, keepdims=True)
    e = jnp.exp(logits - m)
    denom = jnp.sum(e, axis=1, keepdims=True)
    o_ref[...] = (e * pl.reciprocal(denom, approx=False)).astype(o_ref.dtype)


def phi_pequena_forward(x, params, n_classes):
    """x: (B, X_shape) float32. Returns (B, n_classes) softmax probabilities."""
    w1, b1 = params["w1"], params["b1"]
    w23, b23 = params["w23_pad"], params["b23_pad"]

    B, F = x.shape
    H = w1.shape[1]           # 2F
    C_pad = w23.shape[1]      # lane-padded class dim (multiple of 128)

    # Batch tiling: tile must be a multiple of 8 sublanes (or the full dim).
    tb = min(256, _round_up(B, 8))
    B_pad = _round_up(B, tb)
    if B_pad != B:
        x = jnp.pad(x, ((0, B_pad - B), (0, 0)))

    grid = (B_pad // tb,)

    flops = 2 * B_pad * (F * H + H * C_pad)
    bytes_accessed = 4 * (B_pad * F + F * H + H + H * C_pad + C_pad + B_pad * C_pad)

    out = pl.pallas_call(
        phi_pequena_kernel,
        out_shape=jax.ShapeDtypeStruct((B_pad, C_pad), jnp.float32),
        grid_spec=pltpu.PrefetchScalarGridSpec(
            num_scalar_prefetch=0,
            grid=grid,
            in_specs=[
                pl.BlockSpec((tb, F), lambda i: (i, 0)),        # x tile (pipelined)
                pl.BlockSpec(w1.shape, lambda i: (0, 0)),       # weights stay resident
                pl.BlockSpec(b1.shape, lambda i: (0, 0)),
                pl.BlockSpec(w23.shape, lambda i: (0, 0)),
                pl.BlockSpec(b23.shape, lambda i: (0, 0)),
            ],
            out_specs=pl.BlockSpec((tb, C_pad), lambda i: (i, 0)),
        ),
        compiler_params=pltpu.CompilerParams(
            dimension_semantics=("parallel",),
        ),
        cost_estimate=pl.CostEstimate(
            flops=flops,
            transcendentals=B_pad * C_pad,
            bytes_accessed=bytes_accessed,
        ),
    )(x, w1, b1, w23, b23)

    return out[:B, :n_classes]


def init_params(key, x_shape, n_classes, lane_pad=128):
    """PyTorch-style init. Weights stored as (in, out); the last two linears are fused
    and lane-padded at prep time (exact transform, done once on the host)."""
    ks = jax.random.split(key, 6)

    def lin(kw, kb, fan_in, fan_out):
        bound = 1.0 / jnp.sqrt(fan_in)
        w = jax.random.uniform(kw, (fan_in, fan_out), jnp.float32, -bound, bound)
        b = jax.random.uniform(kb, (1, fan_out), jnp.float32, -bound, bound)
        return w, b

    w1, b1 = lin(ks[0], ks[1], x_shape, x_shape * 2)   # linear_1
    w2, b2 = lin(ks[2], ks[3], x_shape * 2, 10)        # last_linear
    w3, b3 = lin(ks[4], ks[5], 10, n_classes)          # linear_last

    # Exact fusion of the two bias-affine linears.
    w23 = w2 @ w3                       # (2F, n_classes)
    b23 = b2 @ w3 + b3                  # (1, n_classes)

    # Lane-pad the class dim: zero weight columns, -1e30 bias so padded logits die in softmax.
    c_pad = _round_up(n_classes, lane_pad)
    w23_pad = jnp.zeros((x_shape * 2, c_pad), jnp.float32).at[:, :n_classes].set(w23)
    b23_pad = jnp.full((1, c_pad), _NEG_BIG, jnp.float32).at[:, :n_classes].set(b23)

    return dict(w1=w1, b1=b1, w2=w2, b2=b2, w3=w3, b3=b3,
                w23_pad=w23_pad, b23_pad=b23_pad)


def reference_forward(x, p):
    h1 = jnp.maximum(x @ p["w1"] + p["b1"], 0.0)
    h2 = h1 @ p["w2"] + p["b2"]
    h3 = h2 @ p["w3"] + p["b3"]
    return jax.nn.softmax(h3, axis=1)


if __name__ == "__main__":
    key = jax.random.PRNGKey(0)
    k_x, k_p = jax.random.split(key)

    batch = 8
    x_shape = 32       # X_shape (input feature dim)
    n_classes = 4

    x = jax.random.normal(k_x, (batch, x_shape), jnp.float32)
    params = init_params(k_p, x_shape, n_classes)

    out = phi_pequena_forward(x, params, n_classes)
    out = jax.block_until_ready(out)

    ref = reference_forward(x, params)
    assert out.shape == (batch, n_classes)
    assert jnp.allclose(out, ref, atol=1e-5, rtol=1e-5)
    assert jnp.allclose(jnp.sum(out, axis=1), jnp.ones((batch,)), atol=1e-5)

    print("KERNEL_OK")
</pallas_src>

<mosaic_0001>
module attributes {stable_mosaic.version = 11 : i64} {
  func.func @phi_pequena_kernel(%arg0: i32, %arg1: memref<8x32xf32, #tpu.memory_space<vmem>>, %arg2: memref<32x64xf32, #tpu.memory_space<vmem>>, %arg3: memref<1x64xf32, #tpu.memory_space<vmem>>, %arg4: memref<64x128xf32, #tpu.memory_space<vmem>>, %arg5: memref<1x128xf32, #tpu.memory_space<vmem>>, %arg6: memref<8x128xf32, #tpu.memory_space<vmem>>) attributes {dimension_semantics = [#tpu.dimension_semantics<parallel>], iteration_bounds = array<i64: 1>, scalar_prefetch = 0 : i64, scratch_operands = 0 : i64, tpu.core_type = #tpu.core_type<tc>, window_params = [{transform_indices = @transform_0, window_bounds = array<i64: 8, 32>}, {pipeline_mode = #tpu.pipeline_mode<synchronous>, transform_indices = @transform_1, window_bounds = array<i64: 32, 64>}, {pipeline_mode = #tpu.pipeline_mode<synchronous>, transform_indices = @transform_2, window_bounds = array<i64: 1, 64>}, {pipeline_mode = #tpu.pipeline_mode<synchronous>, transform_indices = @transform_3, window_bounds = array<i64: 64, 128>}, {pipeline_mode = #tpu.pipeline_mode<synchronous>, transform_indices = @transform_4, window_bounds = array<i64: 1, 128>}, {transform_indices = @transform_5, window_bounds = array<i64: 8, 128>}]} {
    %c0 = arith.constant 0 : index
    %c0_0 = arith.constant 0 : index
    %0 = vector.load %arg1[%c0, %c0_0] : memref<8x32xf32, #tpu.memory_space<vmem>>, vector<8x32xf32>
    %c0_1 = arith.constant 0 : index
    %c0_2 = arith.constant 0 : index
    %1 = vector.load %arg2[%c0_1, %c0_2] : memref<32x64xf32, #tpu.memory_space<vmem>>, vector<32x64xf32>
    %cst = arith.constant dense<0.000000e+00> : vector<8x64xf32>
    %2 = tpu.matmul %0, %1, %cst {dimension_numbers = #tpu.dot_dimension_numbers<[1], [0], [0], [1], [0, 0, 1, 1], [], []>} : vector<8x32xf32>, vector<32x64xf32>, vector<8x64xf32> -> vector<8x64xf32>
    %c0_3 = arith.constant 0 : index
    %c0_4 = arith.constant 0 : index
    %3 = vector.load %arg3[%c0_3, %c0_4] : memref<1x64xf32, #tpu.memory_space<vmem>>, vector<1x64xf32>
    %4 = vector.broadcast %3 : vector<1x64xf32> to vector<8x64xf32>
    %5 = arith.addf %2, %4 : vector<8x64xf32>
    %cst_5 = arith.constant 0.000000e+00 : f32
    %6 = vector.broadcast %cst_5 : f32 to vector<8x64xf32>
    %7 = arith.maximumf %5, %6 : vector<8x64xf32>
    %c0_6 = arith.constant 0 : index
    %c0_7 = arith.constant 0 : index
    %8 = vector.load %arg4[%c0_6, %c0_7] : memref<64x128xf32, #tpu.memory_space<vmem>>, vector<64x128xf32>
    %cst_8 = arith.constant dense<0.000000e+00> : vector<8x128xf32>
    %9 = tpu.matmul %7, %8, %cst_8 {dimension_numbers = #tpu.dot_dimension_numbers<[1], [0], [0], [1], [0, 0, 1, 1], [], []>} : vector<8x64xf32>, vector<64x128xf32>, vector<8x128xf32> -> vector<8x128xf32>
    %c0_9 = arith.constant 0 : index
    %c0_10 = arith.constant 0 : index
    %10 = vector.load %arg5[%c0_9, %c0_10] : memref<1x128xf32, #tpu.memory_space<vmem>>, vector<1x128xf32>
    %11 = vector.broadcast %10 : vector<1x128xf32> to vector<8x128xf32>
    %12 = arith.addf %9, %11 : vector<8x128xf32>
    %cst_11 = arith.constant dense<0xFF800000> : vector<8xf32>
    %13 = vector.multi_reduction <maximumf>, %12, %cst_11 [1] : vector<8x128xf32> to vector<8xf32>
    %14 = vector.shape_cast %13 : vector<8xf32> to vector<8x1xf32>
    %15 = vector.broadcast %14 : vector<8x1xf32> to vector<8x128xf32>
    %16 = arith.subf %12, %15 : vector<8x128xf32>
    %17 = math.exp %16 : vector<8x128xf32>
    %cst_12 = arith.constant dense<0.000000e+00> : vector<8xf32>
    %18 = vector.multi_reduction <add>, %17, %cst_12 [1] : vector<8x128xf32> to vector<8xf32>
    %19 = vector.shape_cast %18 : vector<8xf32> to vector<8x1xf32>
    %20 = tpu.reciprocal %19 : vector<8x1xf32> -> vector<8x1xf32>
    %21 = vector.broadcast %20 : vector<8x1xf32> to vector<8x128xf32>
    %22 = arith.mulf %17, %21 : vector<8x128xf32>
    %c0_13 = arith.constant 0 : index
    %c0_14 = arith.constant 0 : index
    %23 = vector.load %arg6[%c0_13, %c0_14] : memref<8x128xf32, #tpu.memory_space<vmem>>, vector<8x128xf32>
    tpu.vector_store %arg6[%c0_13, %c0_14], %22 {strides = array<i32>} : memref<8x128xf32, #tpu.memory_space<vmem>>, vector<8x128xf32>,
    return
  }
  func.func @transform_0(%arg0: i32) -> (i32, i32) {
    %c0_i32 = arith.constant 0 : i32
    %c0_i32_0 = arith.constant 0 : i32
    return %arg0, %c0_i32 : i32, i32
  }
  func.func @transform_1(%arg0: i32) -> (i32, i32) {
    %c0_i32 = arith.constant 0 : i32
    %c0_i32_0 = arith.constant 0 : i32
    %c0_i32_1 = arith.constant 0 : i32
    return %c0_i32, %c0_i32_0 : i32, i32
  }
  func.func @transform_2(%arg0: i32) -> (i32, i32) {
    %c0_i32 = arith.constant 0 : i32
    %c0_i32_0 = arith.constant 0 : i32
    %c0_i32_1 = arith.constant 0 : i32
    return %c0_i32, %c0_i32_0 : i32, i32
  }
  func.func @transform_3(%arg0: i32) -> (i32, i32) {
    %c0_i32 = arith.constant 0 : i32
    %c0_i32_0 = arith.constant 0 : i32
    %c0_i32_1 = arith.constant 0 : i32
    return %c0_i32, %c0_i32_0 : i32, i32
  }
  func.func @transform_4(%arg0: i32) -> (i32, i32) {
    %c0_i32 = arith.constant 0 : i32
    %c0_i32_0 = arith.constant 0 : i32
    %c0_i32_1 = arith.constant 0 : i32
    return %c0_i32, %c0_i32_0 : i32, i32
  }
  func.func @transform_5(%arg0: i32) -> (i32, i32) {
    %c0_i32 = arith.constant 0 : i32
    %c0_i32_0 = arith.constant 0 : i32
    return %arg0, %c0_i32 : i32, i32
  }
}

</mosaic_0001>

<llo_original>
// kernel: tpu_custom_call.1
$region0: #{tpu_custom_call.1}
  #allocation0 [shape = 'u32[]', space=smem, size = 0x4, offset = 0x4, fixed_abs, tag = 'smem constant byte address 0x4 - core index']
  #allocation1 [shape = 'u32[72,128]{1,0:T(1,128)}', space=vmem, size = 0x9000, scoped, tag = 'internal scratch']
  %s0 = inlined_call_operand.hbm [shape: f32[8,32], index: 0, kind: input, shape index: {}]
  %s1 = inlined_call_operand.hbm [shape: f32[32,64], index: 1, kind: input, shape index: {}]
  %s2 = inlined_call_operand.vmem [shape: f32[1,64], index: 2, kind: input, shape index: {}]
  %s3 = inlined_call_operand.hbm [shape: f32[64,128], index: 3, kind: input, shape index: {}]
  %s4 = inlined_call_operand.vmem [shape: f32[1,128], index: 4, kind: input, shape index: {}]
  %s5 = inlined_call_operand.hbm [shape: f32[8,128], index: 5, kind: output, shape index: {}]
  %s6 = sld [smem:[#allocation0]]
  $region42: #{tpu_custom_call.1} parent=0
    _
  %s8 = ssub.s32 1, %s6
  %s9 = scalar_select 0, %s8, %s6
  $region1: #{tpu_custom_call.1} parent=0
    #allocation2 [shape = 'u8[4096]{0}', space=vmem, size = 0x1000, scoped, tag = 'input window, operand 0, single buffered']
    #allocation3 [shape = 's32[1]{0}', space=sflag, size = 0x4, scoped, tag = 'scoped memory for tpu_custom_call.1']
    #allocation4 [shape = 's32[1]{0}', space=sflag, size = 0x4, scoped, tag = 'scoped memory for tpu_custom_call.1']
    #allocation5 [shape = 'u8[16384]{0}', space=vmem, size = 0x4000, scoped, tag = 'input window, operand 1, single buffered']
    #allocation6 [shape = 's32[1]{0}', space=sflag, size = 0x4, scoped, tag = 'scoped memory for tpu_custom_call.1']
    #allocation7 [shape = 'u8[32768]{0}', space=vmem, size = 0x8000, scoped, tag = 'input window, operand 3, single buffered']
    #allocation8 [shape = 'u8[4096]{0}', space=vmem, size = 0x1000, scoped, tag = 'output window, operand 0, single buffered']
    %10 = vsyncpa [#allocation3], 0
    %11 = vsyncpa [#allocation6], 0
    %12 = vsyncpa [#allocation4], 0
    // Predicated region
    $region2: #{tpu_custom_call.1} parent=1 // pred_check
      _
    $region3: #{tpu_custom_call.1} parent=1 // pred_check_branch
      %14 = sbr.rel (0) target = $region5
    $region4: #{tpu_custom_call.1} parent=1 // pred_region
      %16 = vsyncadd [#allocation3], 0
      %s18 = sshll.u32 %s0, 4
      %s19 = int_to_ptr.hbm [resolvable:$true] %s18
      %s20 = sshll.u32 [#allocation2], 4
      %s21 = int_to_ptr.vmem [resolvable:$true] %s20
      %23 = dma.hbm_to_vmem [thread:$0]  %s19, 128, %s21, [#allocation3]
    $region5: #{tpu_custom_call.1} parent=1 // pred_fallthru
      _
    // Predicated region
    $region6: #{tpu_custom_call.1} parent=1 // pred_check
      _
    $region7: #{tpu_custom_call.1} parent=1 // pred_check_branch
      %25 = sbr.rel (0) target = $region9
    $region8: #{tpu_custom_call.1} parent=1 // pred_region
      %27 = vsyncadd [#allocation6], 0
      %s28 = sshll.u32 %s1, 4
      %s29 = int_to_ptr.hbm [resolvable:$true] %s28
      %s30 = sshll.u32 [#allocation5], 4
      %s31 = int_to_ptr.vmem [resolvable:$true] %s30
      %36 = dma.hbm_to_vmem [thread:$0]  %s29, 512, %s31, [#allocation6], 128, 128, 8
    $region9: #{tpu_custom_call.1} parent=1 // pred_fallthru
      _
    // Predicated region
    $region10: #{tpu_custom_call.1} parent=1 // pred_check
      _
    $region11: #{tpu_custom_call.1} parent=1 // pred_check_branch
      %38 = sbr.rel (0) target = $region13
    $region12: #{tpu_custom_call.1} parent=1 // pred_region
      _
    $region13: #{tpu_custom_call.1} parent=1 // pred_fallthru
      _
    // Predicated region
    $region14: #{tpu_custom_call.1} parent=1 // pred_check
      _
    $region15: #{tpu_custom_call.1} parent=1 // pred_check_branch
      %40 = sbr.rel (0) target = $region17
    $region16: #{tpu_custom_call.1} parent=1 // pred_region
      %42 = vsyncadd [#allocation6], 0
      %s43 = sshll.u32 %s3, 4
      %s44 = int_to_ptr.hbm [resolvable:$true] %s43
      %s45 = sshll.u32 [#allocation7], 4
      %s46 = int_to_ptr.vmem [resolvable:$true] %s45
      %51 = dma.hbm_to_vmem [thread:$0]  %s44, 1024, %s46, [#allocation6], 128, 128, 8
    $region17: #{tpu_custom_call.1} parent=1 // pred_fallthru
      _
    // Predicated region
    $region18: #{tpu_custom_call.1} parent=1 // pred_check
      _
    $region19: #{tpu_custom_call.1} parent=1 // pred_check_branch
      %53 = sbr.rel (0) target = $region21
    $region20: #{tpu_custom_call.1} parent=1 // pred_region
      _
    $region21: #{tpu_custom_call.1} parent=1 // pred_fallthru
      _
    // Predicated region
    $region22: #{tpu_custom_call.1} parent=1 // pred_check
      _
    $region23: #{tpu_custom_call.1} parent=1 // pred_check_branch
      %55 = sbr.rel (0) target = $region25
    $region24: #{tpu_custom_call.1} parent=1 // pred_region
      %57 = dma.done [#allocation3], 128
    $region25: #{tpu_custom_call.1} parent=1 // pred_fallthru
      _
    // Predicated region
    $region26: #{tpu_custom_call.1} parent=1 // pred_check
      _
    $region27: #{tpu_custom_call.1} parent=1 // pred_check_branch
      %59 = sbr.rel (0) target = $region29
    $region28: #{tpu_custom_call.1} parent=1 // pred_region
      %61 = dma.done [#allocation6], 512
    $region29: #{tpu_custom_call.1} parent=1 // pred_fallthru
      _
    // Predicated region
    $region30: #{tpu_custom_call.1} parent=1 // pred_check
      _
    $region31: #{tpu_custom_call.1} parent=1 // pred_check_branch
      %63 = sbr.rel (0) target = $region33
    $region32: #{tpu_custom_call.1} parent=1 // pred_region
      %65 = dma.done [#allocation6], 1024
    $region33: #{tpu_custom_call.1} parent=1 // pred_fallthru
      _
    %v66 = vld [vmem:[#allocation2] sm:$0xff]
    %v67 = vld [vmem:[#allocation5] sm:$0xff]
    %v68 = vld [vmem:[#allocation5 + $0x8] sm:$0xff]
    %v69 = vld [vmem:[#allocation5 + $0x10] sm:$0xff]
    %v70 = vld [vmem:[#allocation5 + $0x18] sm:$0xff]
    %v71 = vld [vmem:[%s2] sm:$0x1]
    %v73 = vperm.slane %v71, 0
    %vm75 = vcmask 261120
    %v77 = vsel %vm75, %v66, 0
    %79 = vmatpush.msra.mxu0 0.0
    %80 = vmatpush.msra.mxu0 0.0
    %81 = vmatpush.msra.mxu0 0.0
    %82 = vmatpush.msra.mxu0 0.0
    %83 = vmatpush.msra.mxu0 0.0
    %84 = vmatpush.msra.mxu0 0.0
    %85 = vmatpush.msra.mxu0 0.0
    %86 = vmatpush.msra.mxu0 0.0
    %87 = vmatpush.msra.mxu0 0.0
    %88 = vmatpush.msra.mxu0 0.0
    %89 = vmatpush.msra.mxu0 0.0
    %90 = vmatpush.msra.mxu0 0.0
    %91 = vmatpush.msra.mxu0 %v70
    %92 = vmatpush.msra.mxu0 %v69
    %93 = vmatpush.msra.mxu0 %v68
    %94 = vmatpush.msra.mxu0 %v67
    %95 = vmatmul.f32.gmra.mxu0 %v77
    %v96 = vpop.f32.mrf.mxu0
    %v97 = vadd.f32 %v73, %v96
    %98 = vdwg.mxu0
    %v99 = vmax.f32 %v97, 0.0
    %v100 = vld [vmem:[#allocation7] sm:$0xff]
    %v101 = vld [vmem:[#allocation7 + $0x8] sm:$0xff]
    %v102 = vld [vmem:[#allocation7 + $0x10] sm:$0xff]
    %v103 = vld [vmem:[#allocation7 + $0x18] sm:$0xff]
    %v104 = vld [vmem:[#allocation7 + $0x20] sm:$0xff]
    %v105 = vld [vmem:[#allocation7 + $0x28] sm:$0xff]
    %v106 = vld [vmem:[#allocation7 + $0x30] sm:$0xff]
    %v107 = vld [vmem:[#allocation7 + $0x38] sm:$0xff]
    %v108 = vld [vmem:[%s4] sm:$0x1]
    %v110 = vperm.slane %v108, 0
    %vm112 = vcmask 523264
    %v114 = vsel %vm112, %v99, 0
    %116 = vmatpush.msra.mxu0 0.0
    %117 = vmatpush.msra.mxu0 0.0
    %118 = vmatpush.msra.mxu0 0.0
    %119 = vmatpush.msra.mxu0 0.0
    %120 = vmatpush.msra.mxu0 0.0
    %121 = vmatpush.msra.mxu0 0.0
    %122 = vmatpush.msra.mxu0 0.0
    %123 = vmatpush.msra.mxu0 0.0
    %124 = vmatpush.msra.mxu0 %v107
    %125 = vmatpush.msra.mxu0 %v106
    %126 = vmatpush.msra.mxu0 %v105
    %127 = vmatpush.msra.mxu0 %v104
    %128 = vmatpush.msra.mxu0 %v103
    %129 = vmatpush.msra.mxu0 %v102
    %130 = vmatpush.msra.mxu0 %v101
    %131 = vmatpush.msra.mxu0 %v100
    %132 = vmatmul.f32.gmra.mxu0 %v114
    %v133 = vpop.f32.mrf.mxu0
    %v134 = vadd.f32 %v110, %v133
    %135 = vdwg.mxu0
    %136 = vmax.xlane.f32.xlu0 %v134
    %v137 = vpop.xlane.xlu0 %136
    %v138 = vsub.f32 %v134, %v137
    %v139 = vmul.f32 %v138, 1.442695
    %v140 = vpow.pop %v139
    %141 = vadd.xlane.f32.xlu0 %v140
    %v142 = vpop.xlane.xlu0 %141
    %v143 = vrcp.pop %v142
    %v144 = vmul.f32 %v142, %v143
    %v145 = vsub.f32 1.0, %v144
    %v146 = vmul.f32 %v143, %v145
    %v147 = vadd.f32 %v143, %v146
    %vm148 = vweird.f32 %v142
    %vm149 = vweird.f32 %v143
    %vm150 = vmor %vm148, %vm149
    %v151 = vsel %vm150, %v143, %v147
    %v152 = vand.u32 2147483647, %v142
    %vm153 = vcmp.eq.f32.partialorder %v152, 8.507059e+37
    %v154 = vand.u32 %v142, 2147483648
    %v155 = vor.u32 1.1754944e-38, %v154
    %v156 = vsel %vm153, %v155, %v151
    %v157 = vmul.f32 %v140, %v156
    %158 = vst [vmem:[#allocation8] sm:$0xff] %v157
    // Predicated region
    $region34: #{tpu_custom_call.1} parent=1 // pred_check
      _
    $region35: #{tpu_custom_call.1} parent=1 // pred_check_branch
      %160 = sbr.rel (0) target = $region37
    $region36: #{tpu_custom_call.1} parent=1 // pred_region
      %162 = vsyncadd [#allocation4], 0
      %s164 = sshll.u32 [#allocation8], 4
      %s165 = int_to_ptr.vmem [resolvable:$true] %s164
      %s166 = sshll.u32 %s5, 4
      %s167 = int_to_ptr.hbm [resolvable:$true] %s166
      %169 = dma.vmem_to_hbm [thread:$0]  %s165, 128, %s167, [#allocation4]
    $region37: #{tpu_custom_call.1} parent=1 // pred_fallthru
      _
    // Predicated region
    $region38: #{tpu_custom_call.1} parent=1 // pred_check
      _
    $region39: #{tpu_custom_call.1} parent=1 // pred_check_branch
      %171 = sbr.rel (0) target = $region41
    $region40: #{tpu_custom_call.1} parent=1 // pred_region
      %173 = dma.done [#allocation4], 128
    $region41: #{tpu_custom_call.1} parent=1 // pred_fallthru
      _
    %174 = vsyncpa [#allocation3], 1
    %175 = vsyncpa [#allocation6], 1
    %176 = vsyncpa [#allocation4], 1

</llo_original>
